<compile_context>
chip_gen: v6e
topology: v6e:2x2x1
jax: 0.10.0
libtpu: 0.0.40
codegen_flags: <defaults>
</compile_context>

<pallas_src>
import jax
import jax.numpy as jnp
from jax import lax
from jax.experimental import pallas as pl
from jax.experimental.pallas import tpu as pltpu


REG_WEIGHT = 0.03
# Conservative double-buffered VMEM budget: fits v5e's 16 MiB scoped default
# and leaves headroom on v6e (32 MiB scoped) / v7x (64 MiB physical).
_VMEM_BUDGET = 8 * 1024 * 1024


# -----------------------------------------------------------------------------
# helpers
# -----------------------------------------------------------------------------
def _pick_hw_tile(hw, bytes_per_lane, budget=_VMEM_BUDGET,
                  candidates=(8192, 4096, 2048, 1024, 512, 256, 128)):
    """Largest lane tile that divides hw and fits the VMEM budget (descending)."""
    divs = [c for c in candidates if c <= hw and hw % c == 0]
    if not divs:
        return None
    for c in divs:                       # descending: largest that fits budget
        if c * bytes_per_lane <= budget:
            return c
    return divs[-1]                      # none fit -> smallest (budget advisory)


# -----------------------------------------------------------------------------
# Kernel 1: NCHW-native 1x1 convolution  (nn.Conv2d(Cin, Cout, 1, 1, 0))
#   x : (B, Cin, HW)   lane-dense (HW on lanes), blocks (tb, Cin, t_hw)
#   w : (Cout, Cin)    MXU LHS
#   b : (Cout, 1)      f32, added post f32-accumulation
#   y : (B, Cout, HW)
# grid = (B // tb, HW // t_hw), both axes "parallel".
# -----------------------------------------------------------------------------
def _conv1x1_kernel(x_ref, w_ref, b_ref, o_ref):
    # x_ref: (tb, Cin, t_hw); w_ref: (Cout, Cin); b_ref: (Cout, 1); o_ref: (tb, Cout, t_hw)
    for bb in range(x_ref.shape[0]):                      # static unroll over batch sub-tile
        acc = jnp.dot(w_ref[...], x_ref[bb], preferred_element_type=jnp.float32)
        o_ref[bb] = (acc + b_ref[...]).astype(o_ref.dtype)


def _conv1x1_nchw_raw(x_bchw, w_oc_ic, b_o):
    """y[b,o,h,w] = sum_i w[o,i] * x[b,i,h,w] + b[o]  (pure forward Pallas call)."""
    B, Cin, H, W = x_bchw.shape
    Cout = w_oc_ic.shape[0]
    HW = H * W
    x3 = x_bchw.reshape(B, Cin, HW)                       # free (trailing dims contiguous)
    out_dtype = x3.dtype
    xi = jnp.dtype(x3.dtype).itemsize
    oi = jnp.dtype(out_dtype).itemsize

    # Lane tile: as big as possible (up to 8192) under a double-buffered VMEM budget.
    bytes_per_lane = 2 * (Cin * xi + Cout * oi)           # x + y, double-buffered
    t_hw = _pick_hw_tile(HW, bytes_per_lane)
    if t_hw is None:
        # rare: HW not 128-aligned -> full-extent lane block (no jnp.pad copy);
        # stores are masked but outputs stay correct.
        t_hw = HW
    n_hw = HW // t_hw

    # Batch tile: for small feature maps fold batch rows into the block so each
    # grid step still moves ~1-2 MB of DMA (amortizes ~0.35us/step overhead).
    per_b_bytes = t_hw * (Cin * xi + Cout * oi)
    tb = 1
    while (2 * tb <= B and B % (2 * tb) == 0
           and 2 * (2 * tb) * per_b_bytes <= _VMEM_BUDGET
           and tb * per_b_bytes < (2 << 20)):
        tb *= 2

    w_k = w_oc_ic.astype(x3.dtype)                        # bf16 weights w/ bf16 activations
    b2 = b_o.reshape(Cout, 1).astype(jnp.float32)         # bias added post f32 accumulation

    y3 = pl.pallas_call(
        _conv1x1_kernel,
        out_shape=jax.ShapeDtypeStruct((B, Cout, HW), out_dtype),
        grid_spec=pltpu.PrefetchScalarGridSpec(
            num_scalar_prefetch=0,
            grid=(B // tb, n_hw),
            in_specs=[
                pl.BlockSpec((tb, Cin, t_hw), lambda bi, j: (bi, 0, j)),
                pl.BlockSpec((Cout, Cin), lambda bi, j: (0, 0)),
                pl.BlockSpec((Cout, 1), lambda bi, j: (0, 0)),
            ],
            out_specs=pl.BlockSpec((tb, Cout, t_hw), lambda bi, j: (bi, 0, j)),
        ),
        compiler_params=pltpu.CompilerParams(
            dimension_semantics=("parallel", "parallel")),
    )(x3, w_k, b2)
    return y3.reshape(B, Cout, H, W)


# custom VJP so jax.grad never differentiates through pallas_call:
#   dx = W^T @ gy  (same Pallas kernel, transposed weight, zero bias)
@jax.custom_vjp
def conv1x1_nchw(x, w, b):
    return _conv1x1_nchw_raw(x, w, b)


def _conv1x1_fwd(x, w, b):
    return _conv1x1_nchw_raw(x, w, b), (x, w, b)


def _conv1x1_bwd(res, gy):
    x, w, b = res
    zeros_bias = jnp.zeros((w.shape[1],), jnp.float32)
    dx = _conv1x1_nchw_raw(gy, w.T, zeros_bias).astype(x.dtype)
    dw = jnp.einsum("bohw,bihw->oi",
                    gy.astype(jnp.float32), x.astype(jnp.float32)).astype(w.dtype)
    db = jnp.sum(gy.astype(jnp.float32), axis=(0, 2, 3)).astype(b.dtype)
    return dx, dw, db


conv1x1_nchw.defvjp(_conv1x1_fwd, _conv1x1_bwd)


# -----------------------------------------------------------------------------
# Kernel 2 (FUSED): backward-dx of the 1x1 head + per-batch sum-of-squares.
#   per_batch[b] = sum_{i,h,w} ( sum_o w[o,i] * gy[b,o,h,w] )^2
# dx lives only in VMEM/vregs -> no dx HBM round trip on the penalty path.
# grid = (HW // t_hw,) "parallel"; whole batch per block; per-chunk partials.
# -----------------------------------------------------------------------------
def _bwd_dx_ssq_kernel(gy_ref, wT_ref, part_ref):
    # gy_ref: (B, Cout, t_hw); wT_ref: (Cin, Cout); part_ref: (1, B, 1)
    B, Cout, _ = gy_ref.shape
    Cin = wT_ref.shape[0]
    wT_b = jnp.broadcast_to(wT_ref[...], (B, Cin, Cout))
    dx = lax.dot_general(
        wT_b, gy_ref[...],
        dimension_numbers=(((2,), (1,)), ((0,), (0,))),
        preferred_element_type=jnp.float32)               # (B, Cin, t_hw)  VMEM only
    s = jnp.sum(dx * dx, axis=2, keepdims=True)           # lane reduce    -> (B, Cin, 1)
    s = jnp.sum(s, axis=1, keepdims=True)                  # sublane reduce -> (B, 1, 1)
    part_ref[0] = s[:, 0, :]                               # (B, 1)


def head_grad_sumsq_pallas(gy_bchw, w_oc_ic):
    """Fused Pallas bwd-dx + sum-of-squares: returns (B,) per-batch penalties."""
    B, Cout, H, W = gy_bchw.shape
    Cin = w_oc_ic.shape[1]
    HW = H * W
    gy3 = gy_bchw.reshape(B, Cout, HW)                    # free reshape
    wT = w_oc_ic.T.astype(gy3.dtype)                      # (Cin, Cout), tiny

    gyi = jnp.dtype(gy3.dtype).itemsize
    bytes_per_lane = 2 * B * Cout * gyi + B * Cin * 4     # dbl-buffered gy + f32 dx temp
    t_hw = _pick_hw_tile(HW, bytes_per_lane)
    if t_hw is None:
        t_hw = HW                                         # rare: HW not 128-aligned
    elif HW // t_hw == 1 and t_hw % 256 == 0:
        t_hw //= 2                                        # >=2 parallel steps (v7x: both TCs)
    n_chunks = HW // t_hw

    partials = pl.pallas_call(
        _bwd_dx_ssq_kernel,
        out_shape=jax.ShapeDtypeStruct((n_chunks, B, 1), jnp.float32),
        grid_spec=pltpu.PrefetchScalarGridSpec(
            num_scalar_prefetch=0,
            grid=(n_chunks,),
            in_specs=[
                pl.BlockSpec((B, Cout, t_hw), lambda c: (0, 0, c)),
                pl.BlockSpec((Cin, Cout), lambda c: (0, 0)),
            ],
            out_specs=pl.BlockSpec((1, B, 1), lambda c: (c, 0, 0)),
        ),
        compiler_params=pltpu.CompilerParams(dimension_semantics=("parallel",)),
    )(gy3, wT)
    return jnp.sum(partials, axis=0)[:, 0]                 # (B,)


# -----------------------------------------------------------------------------
# Kernel 3: standalone per-batch sum of squares (real_penalty on generic grads)
#   x reshaped to (B, rows, 128)  -> lane-dense, full vreg occupancy
#   grid = (n_chunks,) "parallel"; ragged last chunk masked in-kernel.
# -----------------------------------------------------------------------------
def _make_sumsq_kernel(rows_total, tr, need_mask):
    def kernel(x_ref, o_ref):
        xv = x_ref[...].astype(jnp.float32)               # (B, tr, 128)
        if need_mask:
            c = pl.program_id(0)
            row = lax.broadcasted_iota(jnp.int32, xv.shape, 1) + c * tr
            xv = jnp.where(row < rows_total, xv, 0.0)      # OOB rows of ragged chunk -> 0
        s = jnp.sum(xv * xv, axis=2, keepdims=True)        # lane reduce    -> (B, tr, 1)
        s = jnp.sum(s, axis=1, keepdims=True)              # sublane reduce -> (B, 1, 1)
        o_ref[0] = s[:, 0, :]                              # (B, 1)
    return kernel


def sumsq_per_batch_pallas(x_flat):
    """x_flat: (B, M) -> (B,) with out[b] = sum_m x[b, m]^2."""
    B, M = x_flat.shape
    LANES = 128
    if M % LANES:
        # TODO(synk): rare non-128-aligned flat size -> one extra HBM copy via pad;
        #             (B, C, H, W) feature-map gradients are 128-aligned in practice.
        x_flat = jnp.pad(x_flat, ((0, 0), (0, LANES - M % LANES)))
    rows = x_flat.shape[1] // LANES
    x3 = x_flat.reshape(B, rows, LANES)                    # free reshape
    itemsize = jnp.dtype(x3.dtype).itemsize

    # VMEM budget (double-buffered input block fits v5e's scoped default) and
    # >=2 chunks so v7x can split the "parallel" axis across both TensorCores.
    tr_cap = max(8, (_VMEM_BUDGET // (2 * B * LANES * itemsize)) // 8 * 8)
    if rows >= 16:
        tr_cap = min(tr_cap, max(8, (rows // 2) // 8 * 8))
    tr = rows if rows <= tr_cap else tr_cap               # full extent or 8-aligned tile
    n_chunks = pl.cdiv(rows, tr)
    need_mask = (rows % tr) != 0

    partials = pl.pallas_call(
        _make_sumsq_kernel(rows, tr, need_mask),
        out_shape=jax.ShapeDtypeStruct((n_chunks, B, 1), jnp.float32),
        grid_spec=pltpu.PrefetchScalarGridSpec(
            num_scalar_prefetch=0,
            grid=(n_chunks,),
            in_specs=[pl.BlockSpec((B, tr, LANES), lambda c: (0, c, 0))],
            out_specs=pl.BlockSpec((1, B, 1), lambda c: (c, 0, 0)),
        ),
        compiler_params=pltpu.CompilerParams(dimension_semantics=("parallel",)),
    )(x3)
    return jnp.sum(partials, axis=0)[:, 0]                 # (B,)


# -----------------------------------------------------------------------------
# Glue mirroring the PyTorch helpers
# -----------------------------------------------------------------------------
def tee_loss(x, y):
    # torch: (x + y, y.detach())
    return x + y, jax.lax.stop_gradient(y)


def real_penalty_from_grads(grads):
    """torch.cat([g.pow(2).reshape(b,-1).sum(1,keepdim=True) for g in grads], 1).mean()"""
    per_batch = []
    for g in grads:
        if g is None:
            continue
        b = g.shape[0]
        per_batch.append(sumsq_per_batch_pallas(g.reshape(b, -1))[:, None])
    return jnp.mean(jnp.concatenate(per_batch, axis=1))


def _reg_loss_impl(feats, w, b):
    # torch path: loss_D_real = D(image); real_penalty(loss_D_real, image);
    #             reg_loss, _ = tee_loss(0, penalty); (reg_weight*reg_loss).backward()
    # Stand-in loss = mean(1x1-conv head(feats)).  The input-gradient dx = W^T@gy
    # and its per-batch sum-of-squares are FUSED in one Pallas kernel, so dx
    # never round-trips HBM.
    y = _conv1x1_nchw_raw(feats, w, b)                     # forward head (Pallas)
    loss, pull = jax.vjp(jnp.mean, y)                      # generic outer loss of the logits
    gy, = pull(jnp.ones_like(loss))                        # dloss/dy
    per_batch = head_grad_sumsq_pallas(gy, w)              # fused bwd-dx + sum-of-squares
    pen = jnp.mean(per_batch)
    reg_loss, _ = tee_loss(0.0, pen)
    return REG_WEIGHT * reg_loss
    # TODO(synk): the second-order backward of (reg_weight*reg_loss) w.r.t. params
    #             (torch create_graph=True) is wrapper-level autodiff, not reproduced.


_reg_loss_jit = jax.jit(_reg_loss_impl)                    # hoisted: no per-call retracing


# -----------------------------------------------------------------------------
# Module wrapper
# -----------------------------------------------------------------------------
class EPEModelPallas:
    """Pallas stand-in for EPE_model: in-file-defined compute only
      - real_penalty reduction          (fused / standalone Pallas sum-of-squares)
      - tee_loss / 0.03 reg_weight      (glue)
      - a Conv2d(64, 35, 1, 1, 0) head  (Pallas NCHW 1x1-conv w/ custom VJP)
        used as the differentiable loss whose input-gradient feeds the penalty.
    """

    CIN = 64
    COUT = 35
    REG_WEIGHT = REG_WEIGHT

    def __init__(self, key):
        kw, _ = jax.random.split(key)
        std = 0.02 * (2.0 / (self.CIN + self.COUT)) ** 0.5  # xavier-normal, gain 0.02
        self.w = (std * jax.random.normal(kw, (self.COUT, self.CIN))).astype(jnp.float32)
        self.b = jnp.zeros((self.COUT,), jnp.float32)
        # TODO(synk): netG / netD / VGG16 / pretrained-mseg are external modules
        #             with no in-file definition; not reproduced.

    def seg_layer_up_last(self, feats_nchw):
        """nn.Conv2d(64, 35, 1, 1, 0) on NCHW features (stays NCHW end to end)."""
        assert feats_nchw.shape[1] == self.CIN
        return conv1x1_nchw(feats_nchw, self.w, self.b)     # (B, 35, H, W)

    def forward(self, image, seg_features, mode):
        if mode == "seg_logits":
            return self.seg_layer_up_last(seg_features)
        if mode == "reg_loss":
            return _reg_loss_jit(seg_features, self.w, self.b)
        raise ValueError(mode)


# -----------------------------------------------------------------------------
# Demo / self-check
# -----------------------------------------------------------------------------
if __name__ == "__main__":
    key = jax.random.PRNGKey(0)
    k_model, k_feat, k_img = jax.random.split(key, 3)

    model = EPEModelPallas(k_model)

    B, H, W = 2, 16, 16
    # bf16 activations halve HBM read traffic of the (HBM-bound) conv kernels.
    seg_features = jax.random.normal(k_feat, (B, 64, H, W), jnp.float32).astype(jnp.bfloat16)
    image = jax.random.normal(k_img, (B, 3, H, W), jnp.float32)   # shape parity only

    feats_f32 = seg_features.astype(jnp.float32)
    w_f32, b_f32 = model.w, model.b

    # 1) 1x1-conv head (Pallas, NCHW-native, bf16 in / f32 accumulate)
    logits = jax.block_until_ready(model.forward(image, seg_features, mode="seg_logits"))
    ref = jnp.einsum("bchw,oc->bohw", feats_f32, w_f32) + b_f32.reshape(1, -1, 1, 1)
    assert logits.shape == (B, 35, H, W)
    assert jnp.allclose(logits.astype(jnp.float32), ref, atol=5e-3, rtol=5e-2)

    # 2) gradient path through the custom VJP (Pallas dx kernel)
    def ref_loss(feats):
        return jnp.mean(jnp.einsum("bchw,oc->bohw", feats, w_f32)
                        + b_f32.reshape(1, -1, 1, 1))
    g_pallas = jax.grad(lambda f: jnp.mean(model.seg_layer_up_last(f)))(seg_features)
    g_pallas = jax.block_until_ready(g_pallas)
    g_ref = jax.grad(ref_loss)(feats_f32)
    assert jnp.allclose(g_pallas.astype(jnp.float32), g_ref, atol=2e-7, rtol=5e-2)

    # 3) reg_loss: fused Pallas bwd-dx + sum-of-squares (dx never hits HBM) + reg weight
    reg = jax.block_until_ready(model.forward(image, seg_features, mode="reg_loss"))
    reg_ref = 0.03 * jnp.mean(jnp.sum(g_ref.reshape(B, -1) ** 2, axis=1))
    assert jnp.allclose(reg, reg_ref, rtol=5e-2, atol=1e-12)

    # 4) standalone real_penalty reduction (Pallas per-batch sum-of-squares)
    pen = jax.block_until_ready(real_penalty_from_grads([g_ref]))
    pen_ref = jnp.mean(jnp.sum(g_ref.reshape(B, -1) ** 2, axis=1))
    assert jnp.allclose(pen, pen_ref, rtol=1e-3, atol=1e-15)

    # 5) tee_loss glue
    t, d = tee_loss(jnp.float32(1.0), jnp.float32(2.0))
    assert jnp.allclose(t, 3.0) and jnp.allclose(d, 2.0)

    print("KERNEL_OK")
</pallas_src>

<mosaic_0001>
module attributes {stable_mosaic.version = 11 : i64} {
  func.func @_conv1x1_kernel(%arg0: i32, %arg1: i32, %arg2: memref<2x64x256xbf16, #tpu.memory_space<vmem>>, %arg3: memref<35x64xbf16, #tpu.memory_space<vmem>>, %arg4: memref<35x1xf32, #tpu.memory_space<vmem>>, %arg5: memref<2x35x256xbf16, #tpu.memory_space<vmem>>) attributes {dimension_semantics = [#tpu.dimension_semantics<parallel>, #tpu.dimension_semantics<parallel>], iteration_bounds = array<i64: 1, 1>, scalar_prefetch = 0 : i64, scratch_operands = 0 : i64, tpu.core_type = #tpu.core_type<tc>, window_params = [{transform_indices = @transform_0, window_bounds = array<i64: 2, 64, 256>}, {pipeline_mode = #tpu.pipeline_mode<synchronous>, transform_indices = @transform_1, window_bounds = array<i64: 35, 64>}, {pipeline_mode = #tpu.pipeline_mode<synchronous>, transform_indices = @transform_2, window_bounds = array<i64: 35, 1>}, {transform_indices = @transform_3, window_bounds = array<i64: 2, 35, 256>}]} {
    %c0 = arith.constant 0 : index
    %c0_0 = arith.constant 0 : index
    %0 = vector.load %arg3[%c0, %c0_0] : memref<35x64xbf16, #tpu.memory_space<vmem>>, vector<35x64xbf16>
    %c0_1 = arith.constant 0 : index
    %c0_2 = arith.constant 0 : index
    %c0_3 = arith.constant 0 : index
    %1 = vector.load %arg2[%c0_1, %c0_2, %c0_3] : memref<2x64x256xbf16, #tpu.memory_space<vmem>>, vector<1x64x256xbf16>
    %2 = vector.shape_cast %1 : vector<1x64x256xbf16> to vector<64x256xbf16>
    %cst = arith.constant dense<0.000000e+00> : vector<35x256xf32>
    %3 = tpu.matmul %0, %2, %cst {dimension_numbers = #tpu.dot_dimension_numbers<[1], [0], [0], [1], [0, 0, 1, 1], [], []>} : vector<35x64xbf16>, vector<64x256xbf16>, vector<35x256xf32> -> vector<35x256xf32>
    %c0_4 = arith.constant 0 : index
    %c0_5 = arith.constant 0 : index
    %4 = vector.load %arg4[%c0_4, %c0_5] : memref<35x1xf32, #tpu.memory_space<vmem>>, vector<35x1xf32>
    %5 = vector.broadcast %4 : vector<35x1xf32> to vector<35x256xf32>
    %6 = arith.addf %3, %5 : vector<35x256xf32>
    %7 = arith.truncf %6 : vector<35x256xf32> to vector<35x256xbf16>
    %c0_6 = arith.constant 0 : index
    %c0_7 = arith.constant 0 : index
    %c0_8 = arith.constant 0 : index
    %8 = vector.load %arg5[%c0_6, %c0_7, %c0_8] : memref<2x35x256xbf16, #tpu.memory_space<vmem>>, vector<1x35x256xbf16>
    %9 = vector.shape_cast %8 : vector<1x35x256xbf16> to vector<35x256xbf16>
    %10 = vector.shape_cast %7 : vector<35x256xbf16> to vector<1x35x256xbf16>
    tpu.vector_store %arg5[%c0_6, %c0_7, %c0_8], %10 {strides = array<i32>} : memref<2x35x256xbf16, #tpu.memory_space<vmem>>, vector<1x35x256xbf16>,
    %c0_9 = arith.constant 0 : index
    %c0_10 = arith.constant 0 : index
    %11 = vector.load %arg3[%c0_9, %c0_10] : memref<35x64xbf16, #tpu.memory_space<vmem>>, vector<35x64xbf16>
    %c1 = arith.constant 1 : index
    %c0_11 = arith.constant 0 : index
    %c0_12 = arith.constant 0 : index
    %12 = vector.load %arg2[%c1, %c0_11, %c0_12] : memref<2x64x256xbf16, #tpu.memory_space<vmem>>, vector<1x64x256xbf16>
    %13 = vector.shape_cast %12 : vector<1x64x256xbf16> to vector<64x256xbf16>
    %cst_13 = arith.constant dense<0.000000e+00> : vector<35x256xf32>
    %14 = tpu.matmul %11, %13, %cst_13 {dimension_numbers = #tpu.dot_dimension_numbers<[1], [0], [0], [1], [0, 0, 1, 1], [], []>} : vector<35x64xbf16>, vector<64x256xbf16>, vector<35x256xf32> -> vector<35x256xf32>
    %c0_14 = arith.constant 0 : index
    %c0_15 = arith.constant 0 : index
    %15 = vector.load %arg4[%c0_14, %c0_15] : memref<35x1xf32, #tpu.memory_space<vmem>>, vector<35x1xf32>
    %16 = vector.broadcast %15 : vector<35x1xf32> to vector<35x256xf32>
    %17 = arith.addf %14, %16 : vector<35x256xf32>
    %18 = arith.truncf %17 : vector<35x256xf32> to vector<35x256xbf16>
    %c1_16 = arith.constant 1 : index
    %c0_17 = arith.constant 0 : index
    %c0_18 = arith.constant 0 : index
    %19 = vector.load %arg5[%c1_16, %c0_17, %c0_18] : memref<2x35x256xbf16, #tpu.memory_space<vmem>>, vector<1x35x256xbf16>
    %20 = vector.shape_cast %19 : vector<1x35x256xbf16> to vector<35x256xbf16>
    %21 = vector.shape_cast %18 : vector<35x256xbf16> to vector<1x35x256xbf16>
    tpu.vector_store %arg5[%c1_16, %c0_17, %c0_18], %21 {strides = array<i32>} : memref<2x35x256xbf16, #tpu.memory_space<vmem>>, vector<1x35x256xbf16>,
    return
  }
  func.func @transform_0(%arg0: i32, %arg1: i32) -> (i32, i32, i32) {
    %c0_i32 = arith.constant 0 : i32
    %c0_i32_0 = arith.constant 0 : i32
    return %arg0, %c0_i32, %arg1 : i32, i32, i32
  }
  func.func @transform_1(%arg0: i32, %arg1: i32) -> (i32, i32) {
    %c0_i32 = arith.constant 0 : i32
    %c0_i32_0 = arith.constant 0 : i32
    %c0_i32_1 = arith.constant 0 : i32
    return %c0_i32, %c0_i32_0 : i32, i32
  }
  func.func @transform_2(%arg0: i32, %arg1: i32) -> (i32, i32) {
    %c0_i32 = arith.constant 0 : i32
    %c0_i32_0 = arith.constant 0 : i32
    %c0_i32_1 = arith.constant 0 : i32
    return %c0_i32, %c0_i32_0 : i32, i32
  }
  func.func @transform_3(%arg0: i32, %arg1: i32) -> (i32, i32, i32) {
    %c0_i32 = arith.constant 0 : i32
    %c0_i32_0 = arith.constant 0 : i32
    return %arg0, %c0_i32, %arg1 : i32, i32, i32
  }
}

</mosaic_0001>

<llo_original>
// kernel: tpu_custom_call.1
$region0: #{tpu_custom_call.1}
  #allocation0 [shape = 'u32[]', space=smem, size = 0x4, offset = 0x4, fixed_abs, tag = 'smem constant byte address 0x4 - core index']
  #allocation1 [shape = 'u32[144,128]{1,0:T(1,128)}', space=vmem, size = 0x12000, scoped, tag = 'internal scratch']
  %s0 = inlined_call_operand.hbm [shape: bf16[2,64,256], index: 0, kind: input, shape index: {}]
  %s1 = inlined_call_operand.vmem [shape: bf16[35,64], index: 1, kind: input, shape index: {}]
  %s2 = inlined_call_operand.vmem [shape: f32[35,1], index: 2, kind: input, shape index: {}]
  %s3 = inlined_call_operand.vmem [shape: bf16[2,35,256], index: 3, kind: output, shape index: {}]
  %s4 = sld [smem:[#allocation0]]
  $region26: #{tpu_custom_call.1} parent=0
    _
  %s6 = ssub.s32 1, %s4
  %s7 = scalar_select 0, %s6, %s4
  $region1: #{tpu_custom_call.1} parent=0
    #allocation2 [shape = 'u8[65536]{0}', space=vmem, size = 0x10000, scoped, tag = 'input window, operand 0, single buffered']
    #allocation3 [shape = 's32[1]{0}', space=sflag, size = 0x4, scoped, tag = 'scoped memory for tpu_custom_call.1']
    %8 = vsyncpa [#allocation3], 0
    // Predicated region
    $region2: #{tpu_custom_call.1} parent=1 // pred_check
      _
    $region3: #{tpu_custom_call.1} parent=1 // pred_check_branch
      %10 = sbr.rel (0) target = $region5
    $region4: #{tpu_custom_call.1} parent=1 // pred_region
      %s12 = ssub.s32 2048, 2048
      %13 = vsyncadd [#allocation3], %s12
      %s14 = sshll.u32 [#allocation2], 4
      %s15 = int_to_ptr.vmem [resolvable:$true] %s14
      %20 = dma.hbm_to_vmem [thread:$0]  %s0, 2048, %s15, [#allocation3], 128, 128, 8
    $region5: #{tpu_custom_call.1} parent=1 // pred_fallthru
      _
    // Predicated region
    $region6: #{tpu_custom_call.1} parent=1 // pred_check
      _
    $region7: #{tpu_custom_call.1} parent=1 // pred_check_branch
      %22 = sbr.rel (0) target = $region9
    $region8: #{tpu_custom_call.1} parent=1 // pred_region
      _
    $region9: #{tpu_custom_call.1} parent=1 // pred_fallthru
      _
    // Predicated region
    $region10: #{tpu_custom_call.1} parent=1 // pred_check
      _
    $region11: #{tpu_custom_call.1} parent=1 // pred_check_branch
      %24 = sbr.rel (0) target = $region13
    $region12: #{tpu_custom_call.1} parent=1 // pred_region
      _
    $region13: #{tpu_custom_call.1} parent=1 // pred_fallthru
      _
    // Predicated region
    $region14: #{tpu_custom_call.1} parent=1 // pred_check
      _
    $region15: #{tpu_custom_call.1} parent=1 // pred_check_branch
      %26 = sbr.rel (0) target = $region17
    $region16: #{tpu_custom_call.1} parent=1 // pred_region
      %27 = dma.done [#allocation3], 2048
    $region17: #{tpu_custom_call.1} parent=1 // pred_fallthru
      _
    %v29 = vld [vmem:[%s1] sm:$0xf]
    %v30 = vld [vmem:[%s1 + $0x4] sm:$0xf]
    %v31 = vld [vmem:[%s1 + $0x8] sm:$0xf]
    %v32 = vld [vmem:[%s1 + $0xc] sm:$0xf]
    %v33 = vld [vmem:[%s1 + $0x10] sm:$0x3]
    %v34 = vld [vmem:[#allocation2] sm:$0xff]
    %v35 = vld [vmem:[#allocation2 + $0x8] sm:$0xff]
    %v36 = vld [vmem:[#allocation2 + $0x10] sm:$0xff]
    %v37 = vld [vmem:[#allocation2 + $0x18] sm:$0xff]
    %v38 = vld [vmem:[#allocation2 + $0x20] sm:$0xff]
    %v39 = vld [vmem:[#allocation2 + $0x28] sm:$0xff]
    %v40 = vld [vmem:[#allocation2 + $0x30] sm:$0xff]
    %v41 = vld [vmem:[#allocation2 + $0x38] sm:$0xff]
    %v42 = vld [vmem:[%s2] sm:$0xff]
    %v43 = vld [vmem:[%s2 + $0x8] sm:$0xff]
    %v44 = vld [vmem:[%s2 + $0x10] sm:$0xff]
    %v45 = vld [vmem:[%s2 + $0x18] sm:$0xff]
    %v46 = vld [vmem:[%s2 + $0x20] sm:$0x7]
    %48 = vset.pattern.permute.xlu0 0
    %49 = vperm.xlu0 %48, %v42
    %v50 = vpop.permute.xlu0 %49
    %53 = vset.pattern.permute.xlu0 0
    %54 = vperm.xlu0 %53, %v43
    %v55 = vpop.permute.xlu0 %54
    %58 = vset.pattern.permute.xlu0 0
    %59 = vperm.xlu0 %58, %v44
    %v60 = vpop.permute.xlu0 %59
    %63 = vset.pattern.permute.xlu0 0
    %64 = vperm.xlu0 %63, %v45
    %v65 = vpop.permute.xlu0 %64
    %68 = vset.pattern.permute.xlu0 0
    %69 = vperm.xlu0 %68, %v46
    %v70 = vpop.permute.xlu0 %69
    %v77 = vunpack.c.l.b16 %v29
    %v78 = vunpack.c.l.b16 %v30
    %v79 = vunpack.c.l.b16 %v31
    %v80 = vunpack.c.l.b16 %v32
    %v81 = vunpack.c.l.b16 %v33
    %v82 = vpack.c.b16 %v78, %v77
    %v83 = vpack.c.b16 %v80, %v79
    %v84 = vpack.c.b16 %v81, %v81
    %v93 = vunpack.c.l.b16 %v34
    %v94 = vunpack.c.h.b16 %v34
    %v95 = vunpack.c.l.b16 %v35
    %v96 = vunpack.c.h.b16 %v35
    %v97 = vunpack.c.l.b16 %v36
    %v98 = vunpack.c.h.b16 %v36
    %v99 = vunpack.c.l.b16 %v37
    %v100 = vunpack.c.h.b16 %v37
    %v101 = vunpack.c.l.b16 %v38
    %v102 = vunpack.c.h.b16 %v38
    %v103 = vunpack.c.l.b16 %v39
    %v104 = vunpack.c.h.b16 %v39
    %v105 = vunpack.c.l.b16 %v40
    %v106 = vunpack.c.h.b16 %v40
    %v107 = vunpack.c.l.b16 %v41
    %v108 = vunpack.c.h.b16 %v41
    %v109 = vpack.c.b16 %v95, %v93
    %v110 = vpack.c.b16 %v96, %v94
    %v111 = vpack.c.b16 %v99, %v97
    %v112 = vpack.c.b16 %v100, %v98
    %v113 = vpack.c.b16 %v103, %v101
    %v114 = vpack.c.b16 %v104, %v102
    %v115 = vpack.c.b16 %v107, %v105
    %v116 = vpack.c.b16 %v108, %v106
    %vm125 = vcmask 523264
    %v127 = vsel %vm125, %v82, 0
    %v130 = vsel %vm125, %v83, 0
    %v133 = vsel %vm125, %v84, 0
    %135 = vmatprep.subr.bf16.mxu0 0
    %136 = vmatpush1.bf16.msra.mxu0 0
    %137 = vmatprep.subr.bf16.mxu0 0
    %138 = vmatpush1.bf16.msra.mxu0 0
    %139 = vmatprep.subr.bf16.mxu0 0
    %140 = vmatpush1.bf16.msra.mxu0 0
    %141 = vmatprep.subr.bf16.mxu0 0
    %142 = vmatpush1.bf16.msra.mxu0 0
    %143 = vmatprep.subr.bf16.mxu0 %v116
    %144 = vmatpush1.bf16.msra.mxu0 %v115
    %145 = vmatprep.subr.bf16.mxu0 %v114
    %146 = vmatpush1.bf16.msra.mxu0 %v113
    %147 = vmatprep.subr.bf16.mxu0 %v112
    %148 = vmatpush1.bf16.msra.mxu0 %v111
    %149 = vmatprep.subr.bf16.mxu0 %v110
    %150 = vmatpush1.bf16.msra.mxu0 %v109
    %151 = vmatprep.subr.bf16.mxu0 0
    %152 = vmatpush2.bf16.msra.mxu0 0
    %153 = vmatprep.subr.bf16.mxu0 0
    %154 = vmatpush2.bf16.msra.mxu0 0
    %155 = vmatprep.subr.bf16.mxu0 0
    %156 = vmatpush2.bf16.msra.mxu0 0
    %157 = vmatprep.subr.bf16.mxu0 0
    %158 = vmatpush2.bf16.msra.mxu0 0
    %159 = vmatprep.subr.bf16.mxu0 0
    %160 = vmatpush2.bf16.msra.mxu0 0
    %161 = vmatprep.subr.bf16.mxu0 0
    %162 = vmatpush2.bf16.msra.mxu0 0
    %163 = vmatprep.subr.bf16.mxu0 0
    %164 = vmatpush2.bf16.msra.mxu0 0
    %165 = vmatprep.subr.bf16.mxu0 0
    %166 = vmatpush2.bf16.msra.mxu0 0
    %167 = vmatprep.mubr.bf16.mxu0 0
    %168 = vmatmul.mubr.bf16.gmra.mxu0 %v127
    %v169 = vpop.f32.mrf.mxu0
    %v170 = vadd.f32 %v50, %v169
    %v171 = vpop.f32.mrf.mxu0
    %v172 = vadd.f32 %v50, %v171
    %v173 = vpop.f32.mrf.mxu0
    %v174 = vadd.f32 %v55, %v173
    %v175 = vpop.f32.mrf.mxu0
    %v176 = vadd.f32 %v55, %v175
    %177 = vmatprep.mubr.bf16.mxu0 0
    %178 = vmatmul.mubr.bf16.gmra.mxu0 %v130
    %v179 = vpop.f32.mrf.mxu0
    %v180 = vadd.f32 %v60, %v179
    %v181 = vpop.f32.mrf.mxu0
    %v182 = vadd.f32 %v60, %v181
    %v183 = vpop.f32.mrf.mxu0
    %v184 = vadd.f32 %v65, %v183
    %v185 = vpop.f32.mrf.mxu0
    %v186 = vadd.f32 %v65, %v185
    %187 = vmatprep.mubr.bf16.mxu0 0
    %188 = vmatmul.mubr.bf16.gmra.mxu0 %v133
    %v189 = vpop.f32.mrf.mxu0
    %v190 = vadd.f32 %v70, %v189
    %v191 = vpop.f32.mrf.mxu0
    %v192 = vadd.f32 %v70, %v191
    %v193 = vpop.f32.mrf.mxu0
    %v194 = vpop.f32.mrf.mxu0
    %195 = vdwg.mxu0
    %v196 = vpack.c.bf16 %v174, %v170
    %v197 = vpack.c.bf16 %v176, %v172
    %v198 = vpack.c.bf16 %v184, %v180
    %v199 = vpack.c.bf16 %v186, %v182
    %v200 = vpack.c.bf16 %v190, %v190
    %v201 = vpack.c.bf16 %v192, %v192
    %v208 = vunpack.c.l.b16 %v196
    %v209 = vunpack.c.l.b16 %v197
    %v210 = vunpack.c.h.b16 %v196
    %v211 = vunpack.c.h.b16 %v197
    %v212 = vunpack.c.l.b16 %v198
    %v213 = vunpack.c.l.b16 %v199
    %v214 = vunpack.c.h.b16 %v198
    %v215 = vunpack.c.h.b16 %v199
    %v216 = vunpack.c.l.b16 %v200
    %v217 = vunpack.c.l.b16 %v201
    %v218 = vpack.c.b16 %v209, %v208
    %v219 = vpack.c.b16 %v211, %v210
    %v220 = vpack.c.b16 %v213, %v212
    %v221 = vpack.c.b16 %v215, %v214
    %v222 = vpack.c.b16 %v217, %v216
    %228 = vst [vmem:[%s3] sm:$0xff] %v218
    %229 = vst [vmem:[%s3 + $0x8] sm:$0xff] %v219
    %230 = vst [vmem:[%s3 + $0x10] sm:$0xff] %v220
    %231 = vst [vmem:[%s3 + $0x18] sm:$0xff] %v221
    %vm232 = vcmask 1041408
    %vm233 = vsmask.f32 1280
    %vm234 = vmand %vm232, %vm233
    %vm235 = vcmask 1045508
    %vm236 = vsmask.f32 5376
    %vm237 = vmand %vm235, %vm236
    %vm238 = vmor %vm237, %vm234
    %v239 = vld [vmem:[%s3 + $0x20] sm:$0x33]
    %v240 = vsel %vm238, %v222, %v239
    %241 = vst [vmem:[%s3 + $0x20] sm:$0x33] %v240
    %v242 = vld [vmem:[%s1] sm:$0xf]
    %v243 = vld [vmem:[%s1 + $0x4] sm:$0xf]
    %v244 = vld [vmem:[%s1 + $0x8] sm:$0xf]
    %v245 = vld [vmem:[%s1 + $0xc] sm:$0xf]
    %v246 = vld [vmem:[%s1 + $0x10] sm:$0x3]
    %s247 = scalar_lea.vmem [#allocation2], 64
    %v248 = vld [vmem:[%s247] sm:$0xff]
    %v249 = vld [vmem:[%s247 + $0x8] sm:$0xff]
    %v250 = vld [vmem:[%s247 + $0x10] sm:$0xff]
    %v251 = vld [vmem:[%s247 + $0x18] sm:$0xff]
    %v252 = vld [vmem:[%s247 + $0x20] sm:$0xff]
    %v253 = vld [vmem:[%s247 + $0x28] sm:$0xff]
    %v254 = vld [vmem:[%s247 + $0x30] sm:$0xff]
    %v255 = vld [vmem:[%s247 + $0x38] sm:$0xff]
    %v256 = vld [vmem:[%s2] sm:$0xff]
    %v257 = vld [vmem:[%s2 + $0x8] sm:$0xff]
    %v258 = vld [vmem:[%s2 + $0x10] sm:$0xff]
    %v259 = vld [vmem:[%s2 + $0x18] sm:$0xff]
    %v260 = vld [vmem:[%s2 + $0x20] sm:$0x7]
    %262 = vset.pattern.permute.xlu0 0
    %263 = vperm.xlu0 %262, %v256
    %v264 = vpop.permute.xlu0 %263
    %267 = vset.pattern.permute.xlu0 0
    %268 = vperm.xlu0 %267, %v257
    %v269 = vpop.permute.xlu0 %268
    %272 = vset.pattern.permute.xlu0 0
    %273 = vperm.xlu0 %272, %v258
    %v274 = vpop.permute.xlu0 %273
    %277 = vset.pattern.permute.xlu0 0
    %278 = vperm.xlu0 %277, %v259
    %v279 = vpop.permute.xlu0 %278
    %282 = vset.pattern.permute.xlu0 0
    %283 = vperm.xlu0 %282, %v260
    %v284 = vpop.permute.xlu0 %283
    %v291 = vunpack.c.l.b16 %v242
    %v292 = vunpack.c.l.b16 %v243
    %v293 = vunpack.c.l.b16 %v244
    %v294 = vunpack.c.l.b16 %v245
    %v295 = vunpack.c.l.b16 %v246
    %v296 = vpack.c.b16 %v292, %v291
    %v297 = vpack.c.b16 %v294, %v293
    %v298 = vpack.c.b16 %v295, %v295
    %v307 = vunpack.c.l.b16 %v248
    %v308 = vunpack.c.h.b16 %v248
    %v309 = vunpack.c.l.b16 %v249
    %v310 = vunpack.c.h.b16 %v249
    %v311 = vunpack.c.l.b16 %v250
    %v312 = vunpack.c.h.b16 %v250
    %v313 = vunpack.c.l.b16 %v251
    %v314 = vunpack.c.h.b16 %v251
    %v315 = vunpack.c.l.b16 %v252
    %v316 = vunpack.c.h.b16 %v252
    %v317 = vunpack.c.l.b16 %v253
    %v318 = vunpack.c.h.b16 %v253
    %v319 = vunpack.c.l.b16 %v254
    %v320 = vunpack.c.h.b16 %v254
    %v321 = vunpack.c.l.b16 %v255
    %v322 = vunpack.c.h.b16 %v255
    %v323 = vpack.c.b16 %v309, %v307
    %v324 = vpack.c.b16 %v310, %v308
    %v325 = vpack.c.b16 %v313, %v311
    %v326 = vpack.c.b16 %v314, %v312
    %v327 = vpack.c.b16 %v317, %v315
    %v328 = vpack.c.b16 %v318, %v316
    %v329 = vpack.c.b16 %v321, %v319
    %v330 = vpack.c.b16 %v322, %v320
    %v340 = vsel %vm125, %v296, 0
    %v343 = vsel %vm125, %v297, 0
    %v346 = vsel %vm125, %v298, 0
    %348 = vmatprep.subr.bf16.mxu0 0
    %349 = vmatpush1.bf16.msra.mxu0 0
    %350 = vmatprep.subr.bf16.mxu0 0
    %351 = vmatpush1.bf16.msra.mxu0 0
    %352 = vmatprep.subr.bf16.mxu0 0
    %353 = vmatpush1.bf16.msra.mxu0 0
    %354 = vmatprep.subr.bf16.mxu0 0
    %355 = vmatpush1.bf16.msra.mxu0 0
    %356 = vmatprep.subr.bf16.mxu0 %v330
    %357 = vmatpush1.bf16.msra.mxu0 %v329
    %358 = vmatprep.subr.bf16.mxu0 %v328
    %359 = vmatpush1.bf16.msra.mxu0 %v327
    %360 = vmatprep.subr.bf16.mxu0 %v326
    %361 = vmatpush1.bf16.msra.mxu0 %v325
    %362 = vmatprep.subr.bf16.mxu0 %v324
    %363 = vmatpush1.bf16.msra.mxu0 %v323
    %364 = vmatprep.subr.bf16.mxu0 0
    %365 = vmatpush2.bf16.msra.mxu0 0
    %366 = vmatprep.subr.bf16.mxu0 0
    %367 = vmatpush2.bf16.msra.mxu0 0
    %368 = vmatprep.subr.bf16.mxu0 0
    %369 = vmatpush2.bf16.msra.mxu0 0
    %370 = vmatprep.subr.bf16.mxu0 0
    %371 = vmatpush2.bf16.msra.mxu0 0
    %372 = vmatprep.subr.bf16.mxu0 0
    %373 = vmatpush2.bf16.msra.mxu0 0
    %374 = vmatprep.subr.bf16.mxu0 0
    %375 = vmatpush2.bf16.msra.mxu0 0
    %376 = vmatprep.subr.bf16.mxu0 0
    %377 = vmatpush2.bf16.msra.mxu0 0
    %378 = vmatprep.subr.bf16.mxu0 0
    %379 = vmatpush2.bf16.msra.mxu0 0
    %380 = vmatprep.mubr.bf16.mxu0 0
    %381 = vmatmul.mubr.bf16.gmra.mxu0 %v340
    %v382 = vpop.f32.mrf.mxu0
    %v383 = vadd.f32 %v264, %v382
    %v384 = vpop.f32.mrf.mxu0
    %v385 = vadd.f32 %v264, %v384
    %v386 = vpop.f32.mrf.mxu0
    %v387 = vadd.f32 %v269, %v386
    %v388 = vpop.f32.mrf.mxu0
    %v389 = vadd.f32 %v269, %v388
    %390 = vmatprep.mubr.bf16.mxu0 0
    %391 = vmatmul.mubr.bf16.gmra.mxu0 %v343
    %v392 = vpop.f32.mrf.mxu0
    %v393 = vadd.f32 %v274, %v392
    %v394 = vpop.f32.mrf.mxu0
    %v395 = vadd.f32 %v274, %v394
    %v396 = vpop.f32.mrf.mxu0
    %v397 = vadd.f32 %v279, %v396
    %v398 = vpop.f32.mrf.mxu0
    %v399 = vadd.f32 %v279, %v398
    %400 = vmatprep.mubr.bf16.mxu0 0
    %401 = vmatmul.mubr.bf16.gmra.mxu0 %v346
    %v402 = vpop.f32.mrf.mxu0
    %v403 = vadd.f32 %v284, %v402
    %v404 = vpop.f32.mrf.mxu0
    %v405 = vadd.f32 %v284, %v404
    %v406 = vpop.f32.mrf.mxu0
    %v407 = vpop.f32.mrf.mxu0
    %408 = vdwg.mxu0
    %v409 = vpack.c.bf16 %v387, %v383
    %v410 = vpack.c.bf16 %v389, %v385
    %v411 = vpack.c.bf16 %v397, %v393
    %v412 = vpack.c.bf16 %v399, %v395
    %v413 = vpack.c.bf16 %v403, %v403
    %v414 = vpack.c.bf16 %v405, %v405
    %v421 = vunpack.c.l.b16 %v409
    %v422 = vunpack.c.l.b16 %v410
    %v423 = vunpack.c.h.b16 %v409
    %v424 = vunpack.c.h.b16 %v410
    %v425 = vunpack.c.l.b16 %v411
    %v426 = vunpack.c.l.b16 %v412
    %v427 = vunpack.c.h.b16 %v411
    %v428 = vunpack.c.h.b16 %v412
    %v429 = vunpack.c.l.b16 %v413
    %v430 = vunpack.c.l.b16 %v414
    %v431 = vpack.c.b16 %v422, %v421
    %v432 = vpack.c.b16 %v424, %v423
    %v433 = vpack.c.b16 %v426, %v425
    %v434 = vpack.c.b16 %v428, %v427
    %v435 = vpack.c.b16 %v430, %v429
    %s441 = scalar_lea.vmem %s3, 40
    %442 = vst [vmem:[%s441] sm:$0xff] %v431
    %443 = vst [vmem:[%s441 + $0x8] sm:$0xff] %v432
    %444 = vst [vmem:[%s441 + $0x10] sm:$0xff] %v433
    %445 = vst [vmem:[%s441 + $0x18] sm:$0xff] %v434
    %v446 = vld [vmem:[%s441 + $0x20] sm:$0x33]
    %v447 = vsel %vm238, %v435, %v446
    %448 = vst [vmem:[%s441 + $0x20] sm:$0x33] %v447
    // Predicated region
    $region18: #{tpu_custom_call.1} parent=1 // pred_check
      _
    $region19: #{tpu_custom_call.1} parent=1 // pred_check_branch
      %450 = sbr.rel (0) target = $region21
    $region20: #{tpu_custom_call.1} parent=1 // pred_region
      _
    $region21: #{tpu_custom_call.1} parent=1 // pred_fallthru
      _
    // Predicated region
    $region22: #{tpu_custom_call.1} parent=1 // pred_check
      _
    $region23: #{tpu_custom_call.1} parent=1 // pred_check_branch
      %452 = sbr.rel (0) target = $region25
    $region24: #{tpu_custom_call.1} parent=1 // pred_region
      _
    $region25: #{tpu_custom_call.1} parent=1 // pred_fallthru
      _
    %453 = vsyncpa [#allocation3], 1

</llo_original>
